<compile_context>
chip_gen: v6e
topology: v6e:2x2x1
jax: 0.10.0
libtpu: 0.0.40
codegen_flags: <defaults>
</compile_context>

<pallas_src>
import functools

import jax
import jax.numpy as jnp
from jax.experimental import pallas as pl
from jax.experimental.pallas import tpu as pltpu

EPS = 1e-5
NUM_PRIMITIVES = 5  # none, skip, avg_pool_3, max_pool_3, conv_3


# ----------------------------------------------------------------------------
# Kernel 1: ReLU -> 1x1 Conv1d (bias=False) -> BatchNorm1d(affine=False)
#           operating on a (Cin, N*L) slab; one MXU dot for the whole batch.
# ----------------------------------------------------------------------------
def _relu_conv_bn_kernel(x_ref, w_ref, o_ref, *, inv_cnt):
    # x_ref: (Cin, N*L)   w_ref: (Cout, Cin)   o_ref: (Cout, N*L)
    y = jnp.maximum(x_ref[...], 0.0)                                  # ReLU
    z = jnp.dot(w_ref[...], y, preferred_element_type=jnp.float32)    # 1x1 conv
    # BatchNorm1d (training-mode batch stats, biased variance); two-pass
    # (centered) variance for numerical stability.
    mean = jnp.sum(z, axis=1, keepdims=True) * inv_cnt
    zc = z - mean
    var = jnp.sum(zc * zc, axis=1, keepdims=True) * inv_cnt
    o_ref[...] = (zc * jax.lax.rsqrt(var + EPS)).astype(o_ref.dtype)


def relu_conv_bn(x_slab, w):
    c_out = w.shape[0]
    nl = x_slab.shape[1]
    kernel = functools.partial(_relu_conv_bn_kernel, inv_cnt=1.0 / float(nl))
    return pl.pallas_call(
        kernel,
        out_shape=jax.ShapeDtypeStruct((c_out, nl), jnp.float32),
        in_specs=[
            pl.BlockSpec(memory_space=pltpu.MemorySpace.VMEM),
            pl.BlockSpec(memory_space=pltpu.MemorySpace.VMEM),
        ],
        out_specs=pl.BlockSpec(memory_space=pltpu.MemorySpace.VMEM),
    )(x_slab, w)


# ----------------------------------------------------------------------------
# Kernel 2: one whole step of the cell.
#   grid = (num_edges,)   — "arbitrary" reduction axis, output block resident.
#   Each grid point processes one edge: MixedOp(states[j], weights[offset+j])
#   and accumulates into the (C, N*L) output slab.
# ----------------------------------------------------------------------------
def _step_kernel(alpha_ref, x_ref, w_ref, o_ref, *, seq_len, inv_cnt):
    # alpha_ref: (E, NUM_PRIMITIVES) f32 in SMEM
    # x_ref:     (C, N*L)  current edge's input state   (slab)
    # w_ref:     (C, 3*C)  fused conv_3 taps [w(l-1) | w(l) | w(l+1)]
    # o_ref:     (C, N*L)  accumulator (same block for every edge)
    e = pl.program_id(0)
    x = x_ref[...]
    c, nl = x.shape

    # Per-(batch,position) boundary masks: lane index = n*L + l.
    lane = jax.lax.broadcasted_iota(jnp.int32, (c, nl), 1)
    pos = lane % seq_len
    is_first = pos == 0
    is_last = pos == seq_len - 1

    # +/-1 shifts along L via XLU roll over the combined lane axis; the
    # wrapped-around lanes (batch boundaries and slab ends) are masked below.
    prv = pltpu.roll(x, 1, 1)         # out[:, j] = x[:, j-1]
    nxt = pltpu.roll(x, nl - 1, 1)    # out[:, j] = x[:, j+1]
    prv0 = jnp.where(is_first, 0.0, prv)     # zero padding (avg / conv)
    nxt0 = jnp.where(is_last, 0.0, nxt)

    # avg_pool_3 (count_include_pad=True -> always /3)
    avg = (prv0 + x + nxt0) * (1.0 / 3.0)

    # max_pool_3 (-inf padding)
    neg_inf = float("-inf")
    mxp = jnp.maximum(
        jnp.maximum(jnp.where(is_first, neg_inf, prv), x),
        jnp.where(is_last, neg_inf, nxt),
    )

    # conv_3: ReLU -> Conv1d(C, C, 3, pad=1, bias=False).
    # Shift commutes with ReLU because the padding is 0 and relu(0)=0, so the
    # shifted ReLU'd inputs are recovered from prv0/nxt0 with cheap VPU maxes.
    y = jnp.maximum(x, 0.0)
    y_p = jnp.maximum(prv0, 0.0)
    y_n = jnp.maximum(nxt0, 0.0)
    y3 = jnp.concatenate([y_p, y, y_n], axis=0)                   # (3C, N*L)
    conv = jnp.dot(w_ref[...], y3, preferred_element_type=jnp.float32)

    # alpha[e, 0] is 'none' (zero op): contributes exactly nothing.
    a_skip = alpha_ref[e, 1]
    a_avg = alpha_ref[e, 2]
    a_max = alpha_ref[e, 3]
    a_conv = alpha_ref[e, 4]

    def bn_scaled(z, a):
        # BatchNorm1d(affine=False) with batch stats over (N, L) == lane axis,
        # alpha folded into the scale (scaled normalize in one multiply).
        m = jnp.sum(z, axis=1, keepdims=True) * inv_cnt
        zc = z - m
        var = jnp.sum(zc * zc, axis=1, keepdims=True) * inv_cnt
        return (a * jax.lax.rsqrt(var + EPS)) * zc

    contrib = (a_skip * x
               + bn_scaled(avg, a_avg)
               + bn_scaled(mxp, a_max)
               + bn_scaled(conv, a_conv))

    @pl.when(e == 0)
    def _():
        o_ref[...] = jnp.zeros_like(o_ref)

    o_ref[...] += contrib.astype(o_ref.dtype)


def mixed_step(x_stack, alpha, w_stack, *, seq_len):
    # x_stack: (E, C, N*L)   alpha: (E, NUM_PRIMITIVES)   w_stack: (E, C, 3C)
    e_cnt, c, nl = x_stack.shape
    kernel = functools.partial(_step_kernel, seq_len=seq_len,
                               inv_cnt=1.0 / float(nl))
    return pl.pallas_call(
        kernel,
        out_shape=jax.ShapeDtypeStruct((c, nl), jnp.float32),
        grid=(e_cnt,),
        in_specs=[
            pl.BlockSpec(memory_space=pltpu.MemorySpace.SMEM),        # alpha
            pl.BlockSpec((None, c, nl), lambda e: (e, 0, 0)),          # states
            pl.BlockSpec((None, c, 3 * c), lambda e: (e, 0, 0)),       # conv W
        ],
        out_specs=pl.BlockSpec((c, nl), lambda e: (0, 0)),
        compiler_params=pltpu.CompilerParams(
            dimension_semantics=("arbitrary",)),
    )(alpha, x_stack, w_stack)


# ----------------------------------------------------------------------------
# Cell_Stuff_Decoder forward (reduction=False, reduction_prev=False path).
# ----------------------------------------------------------------------------
def cell_stuff_decoder_forward(params, s0, s1, s2, weights_1, weights_2,
                               *, steps, multiplier):
    del weights_2  # only used by the (unimplemented) reduction=True branch
    n_b, _, length = s0.shape

    def to_slab(x):  # (N, C, L) -> (C, N*L)  lane index = n*L + l
        return jnp.transpose(x, (1, 0, 2)).reshape(x.shape[1], n_b * length)

    s0 = relu_conv_bn(to_slab(s0), params["pre0_w"])
    s1 = relu_conv_bn(to_slab(s1), params["pre1_w"])
    s2 = relu_conv_bn(to_slab(s2), params["pre2_w"])

    states = [s0, s1, s2]
    offset = 0
    for _ in range(steps):
        n_edges = len(states)
        x_stack = jnp.stack(states, axis=0)                      # (E, C, N*L)
        alpha = weights_1[offset:offset + n_edges]                # (E, 5)
        w_stack = params["op_w_fused"][offset:offset + n_edges]   # (E, C, 3C)
        s = mixed_step(x_stack, alpha, w_stack, seq_len=length)
        offset += n_edges
        states.append(s)

    out_slab = jnp.concatenate(states[-multiplier:], axis=0)      # (m*C, N*L)
    c_out = out_slab.shape[0]
    return jnp.transpose(out_slab.reshape(c_out, n_b, length), (1, 0, 2))


def init_params(key, c_prev_prev, c_prev, c, num_edges):
    ks = jax.random.split(key, 4)
    return {
        "pre0_w": 0.1 * jax.random.normal(ks[0], (c, c_prev_prev), jnp.float32),
        "pre1_w": 0.1 * jax.random.normal(ks[1], (c, c_prev), jnp.float32),
        "pre2_w": 0.1 * jax.random.normal(ks[2], (c, 2 * c_prev), jnp.float32),
        # conv_3 weights stored pre-fused: [w(tap l-1) | w(tap l) | w(tap l+1)]
        "op_w_fused": 0.1 * jax.random.normal(ks[3], (num_edges, c, 3 * c),
                                              jnp.float32),
    }


if __name__ == "__main__":
    # Small config consistent with the module; L chosen so N*L = 128 lanes
    # (lane-dense slab for the kernels).
    steps, multiplier = 2, 2
    N, L = 2, 64
    C_prev_prev, C_prev, C = 8, 8, 8
    num_edges = sum(3 + i for i in range(steps))  # 7

    key = jax.random.PRNGKey(0)
    k_s0, k_s1, k_s2, k_w1, k_w2, k_p = jax.random.split(key, 6)

    s0 = jax.random.normal(k_s0, (N, C_prev_prev, L), jnp.float32)
    s1 = jax.random.normal(k_s1, (N, C_prev, L), jnp.float32)
    s2 = jax.random.normal(k_s2, (N, 2 * C_prev, L), jnp.float32)
    weights_1 = jax.nn.softmax(
        jax.random.normal(k_w1, (num_edges, NUM_PRIMITIVES), jnp.float32), axis=-1)
    weights_2 = jax.nn.softmax(
        jax.random.normal(k_w2, (3, NUM_PRIMITIVES), jnp.float32), axis=-1)

    params = init_params(k_p, C_prev_prev, C_prev, C, num_edges)

    fwd = functools.partial(cell_stuff_decoder_forward,
                            steps=steps, multiplier=multiplier)
    out = fwd(params, s0, s1, s2, weights_1, weights_2)
    out = jax.block_until_ready(out)
    assert out.shape == (N, multiplier * C, L), out.shape
    assert bool(jnp.all(jnp.isfinite(out)))
    print("KERNEL_OK")
</pallas_src>

<mosaic_0001>
module attributes {stable_mosaic.version = 11 : i64} {
  func.func @_relu_conv_bn_kernel(%arg0: memref<8x128xf32, #tpu.memory_space<vmem>>, %arg1: memref<8x8xf32, #tpu.memory_space<vmem>>, %arg2: memref<8x128xf32, #tpu.memory_space<vmem>>) attributes {dimension_semantics = [], scalar_prefetch = 0 : i64, scratch_operands = 0 : i64, tpu.core_type = #tpu.core_type<tc>} {
    %c0 = arith.constant 0 : index
    %c0_0 = arith.constant 0 : index
    %0 = vector.load %arg0[%c0, %c0_0] : memref<8x128xf32, #tpu.memory_space<vmem>>, vector<8x128xf32>
    %cst = arith.constant 0.000000e+00 : f32
    %1 = vector.broadcast %cst : f32 to vector<8x128xf32>
    %2 = arith.maximumf %0, %1 : vector<8x128xf32>
    %c0_1 = arith.constant 0 : index
    %c0_2 = arith.constant 0 : index
    %3 = vector.load %arg1[%c0_1, %c0_2] : memref<8x8xf32, #tpu.memory_space<vmem>>, vector<8x8xf32>
    %cst_3 = arith.constant dense<0.000000e+00> : vector<8x128xf32>
    %4 = tpu.matmul %3, %2, %cst_3 {dimension_numbers = #tpu.dot_dimension_numbers<[1], [0], [0], [1], [0, 0, 1, 1], [], []>} : vector<8x8xf32>, vector<8x128xf32>, vector<8x128xf32> -> vector<8x128xf32>
    %cst_4 = arith.constant dense<0.000000e+00> : vector<8xf32>
    %5 = vector.multi_reduction <add>, %4, %cst_4 [1] : vector<8x128xf32> to vector<8xf32>
    %6 = vector.shape_cast %5 : vector<8xf32> to vector<8x1xf32>
    %cst_5 = arith.constant 7.812500e-03 : f32
    %7 = vector.broadcast %cst_5 : f32 to vector<8x1xf32>
    %8 = arith.mulf %6, %7 : vector<8x1xf32>
    %9 = vector.broadcast %8 : vector<8x1xf32> to vector<8x128xf32>
    %10 = arith.subf %4, %9 : vector<8x128xf32>
    %11 = arith.mulf %10, %10 : vector<8x128xf32>
    %cst_6 = arith.constant dense<0.000000e+00> : vector<8xf32>
    %12 = vector.multi_reduction <add>, %11, %cst_6 [1] : vector<8x128xf32> to vector<8xf32>
    %13 = vector.shape_cast %12 : vector<8xf32> to vector<8x1xf32>
    %cst_7 = arith.constant 7.812500e-03 : f32
    %14 = vector.broadcast %cst_7 : f32 to vector<8x1xf32>
    %15 = arith.mulf %13, %14 : vector<8x1xf32>
    %cst_8 = arith.constant 9.99999974E-6 : f32
    %16 = vector.broadcast %cst_8 : f32 to vector<8x1xf32>
    %17 = arith.addf %15, %16 : vector<8x1xf32>
    %18 = math.rsqrt %17 : vector<8x1xf32>
    %19 = vector.broadcast %18 : vector<8x1xf32> to vector<8x128xf32>
    %20 = arith.mulf %10, %19 : vector<8x128xf32>
    %c0_9 = arith.constant 0 : index
    %c0_10 = arith.constant 0 : index
    %21 = vector.load %arg2[%c0_9, %c0_10] : memref<8x128xf32, #tpu.memory_space<vmem>>, vector<8x128xf32>
    tpu.vector_store %arg2[%c0_9, %c0_10], %20 {strides = array<i32>} : memref<8x128xf32, #tpu.memory_space<vmem>>, vector<8x128xf32>,
    return
  }
}

</mosaic_0001>

<llo_original>
// kernel: tpu_custom_call.1
$region0: #{tpu_custom_call.1}
  #allocation0 [shape = 'u32[]', space=smem, size = 0x4, offset = 0x4, fixed_abs, tag = 'smem constant byte address 0x4 - core index']
  #allocation1 [shape = 'u32[144,128]{1,0:T(1,128)}', space=vmem, size = 0x12000, scoped, tag = 'internal scratch']
  %s0 = inlined_call_operand.hbm [shape: f32[8,128], index: 0, kind: input, shape index: {}]
  %s1 = inlined_call_operand.hbm [shape: f32[8,8], index: 1, kind: input, shape index: {}]
  %s2 = inlined_call_operand.hbm [shape: f32[8,128], index: 2, kind: output, shape index: {}]
  %s3 = sld [smem:[#allocation0]]
  $region26: #{tpu_custom_call.1} parent=0
    _
  %s5 = ssub.s32 1, %s3
  %s6 = scalar_select 0, %s5, %s3
  $region1: #{tpu_custom_call.1} parent=0
    #allocation2 [shape = 'u8[4096]{0}', space=vmem, size = 0x1000, scoped, tag = 'input window, operand 0, single buffered']
    #allocation3 [shape = 's32[1]{0}', space=sflag, size = 0x4, scoped, tag = 'scoped memory for tpu_custom_call.1']
    #allocation4 [shape = 's32[1]{0}', space=sflag, size = 0x4, scoped, tag = 'scoped memory for tpu_custom_call.1']
    #allocation5 [shape = 'u8[4096]{0}', space=vmem, size = 0x1000, scoped, tag = 'input window, operand 1, single buffered']
    #allocation6 [shape = 's32[1]{0}', space=sflag, size = 0x4, scoped, tag = 'scoped memory for tpu_custom_call.1']
    #allocation7 [shape = 'u8[4096]{0}', space=vmem, size = 0x1000, scoped, tag = 'output window, operand 0, single buffered']
    %7 = vsyncpa [#allocation3], 0
    %8 = vsyncpa [#allocation6], 0
    %9 = vsyncpa [#allocation4], 0
    // Predicated region
    $region2: #{tpu_custom_call.1} parent=1 // pred_check
      _
    $region3: #{tpu_custom_call.1} parent=1 // pred_check_branch
      %11 = sbr.rel (0) target = $region5
    $region4: #{tpu_custom_call.1} parent=1 // pred_region
      %s13 = ssub.s32 128, 128
      %14 = vsyncadd [#allocation3], %s13
      %s16 = sshll.u32 [#allocation2], 4
      %s17 = int_to_ptr.vmem [resolvable:$true] %s16
      %19 = dma.hbm_to_vmem [thread:$0]  %s0, 128, %s17, [#allocation3]
    $region5: #{tpu_custom_call.1} parent=1 // pred_fallthru
      _
    // Predicated region
    $region6: #{tpu_custom_call.1} parent=1 // pred_check
      _
    $region7: #{tpu_custom_call.1} parent=1 // pred_check_branch
      %21 = sbr.rel (0) target = $region9
    $region8: #{tpu_custom_call.1} parent=1 // pred_region
      %s23 = ssub.s32 128, 128
      %24 = vsyncadd [#allocation6], %s23
      %s26 = sshll.u32 [#allocation5], 4
      %s27 = int_to_ptr.vmem [resolvable:$true] %s26
      %29 = dma.hbm_to_vmem [thread:$0]  %s1, 128, %s27, [#allocation6]
    $region9: #{tpu_custom_call.1} parent=1 // pred_fallthru
      _
    // Predicated region
    $region10: #{tpu_custom_call.1} parent=1 // pred_check
      _
    $region11: #{tpu_custom_call.1} parent=1 // pred_check_branch
      %31 = sbr.rel (0) target = $region13
    $region12: #{tpu_custom_call.1} parent=1 // pred_region
      %32 = dma.done [#allocation3], 128
    $region13: #{tpu_custom_call.1} parent=1 // pred_fallthru
      _
    // Predicated region
    $region14: #{tpu_custom_call.1} parent=1 // pred_check
      _
    $region15: #{tpu_custom_call.1} parent=1 // pred_check_branch
      %34 = sbr.rel (0) target = $region17
    $region16: #{tpu_custom_call.1} parent=1 // pred_region
      %35 = dma.done [#allocation6], 128
    $region17: #{tpu_custom_call.1} parent=1 // pred_fallthru
      _
    %v36 = vld [vmem:[#allocation2] sm:$0xff]
    %v37 = vmax.f32 %v36, 0.0
    %v38 = vld [vmem:[#allocation5] sm:$0xff]
    %vm39 = vcmask 64512
    %v41 = vsel %vm39, %v38, 0
    %43 = vmatprep.subr.mxu0 0.0
    %44 = vmatpush1.msra.mxu0 0.0
    %45 = vmatprep.subr.mxu0 0.0
    %46 = vmatpush1.msra.mxu0 0.0
    %47 = vmatprep.subr.mxu0 0.0
    %48 = vmatpush1.msra.mxu0 0.0
    %49 = vmatprep.subr.mxu0 0.0
    %50 = vmatpush1.msra.mxu0 0.0
    %51 = vmatprep.subr.mxu0 0.0
    %52 = vmatpush1.msra.mxu0 0.0
    %53 = vmatprep.subr.mxu0 0.0
    %54 = vmatpush1.msra.mxu0 0.0
    %55 = vmatprep.subr.mxu0 0.0
    %56 = vmatpush1.msra.mxu0 0.0
    %57 = vmatprep.subr.mxu0 0.0
    %58 = vmatpush1.msra.mxu0 0.0
    %59 = vmatprep.subr.mxu0 0.0
    %60 = vmatpush1.msra.mxu0 0.0
    %61 = vmatprep.subr.mxu0 0.0
    %62 = vmatpush1.msra.mxu0 0.0
    %63 = vmatprep.subr.mxu0 0.0
    %64 = vmatpush1.msra.mxu0 0.0
    %65 = vmatprep.subr.mxu0 0.0
    %66 = vmatpush1.msra.mxu0 0.0
    %67 = vmatprep.subr.mxu0 0.0
    %68 = vmatpush1.msra.mxu0 0.0
    %69 = vmatprep.subr.mxu0 0.0
    %70 = vmatpush1.msra.mxu0 0.0
    %71 = vmatprep.subr.mxu0 0.0
    %72 = vmatpush1.msra.mxu0 0.0
    %73 = vmatprep.subr.mxu0 0.0
    %74 = vmatpush1.msra.mxu0 %v37
    %75 = vmatprep.subr.mxu0 0.0
    %76 = vmatpush2.msra.mxu0 0.0
    %77 = vmatprep.subr.mxu0 0.0
    %78 = vmatpush2.msra.mxu0 0.0
    %79 = vmatprep.subr.mxu0 0.0
    %80 = vmatpush2.msra.mxu0 0.0
    %81 = vmatprep.subr.mxu0 0.0
    %82 = vmatpush2.msra.mxu0 0.0
    %83 = vmatprep.subr.mxu0 0.0
    %84 = vmatpush2.msra.mxu0 0.0
    %85 = vmatprep.subr.mxu0 0.0
    %86 = vmatpush2.msra.mxu0 0.0
    %87 = vmatprep.subr.mxu0 0.0
    %88 = vmatpush2.msra.mxu0 0.0
    %89 = vmatprep.subr.mxu0 0.0
    %90 = vmatpush2.msra.mxu0 0.0
    %91 = vmatprep.subr.mxu0 0.0
    %92 = vmatpush2.msra.mxu0 0.0
    %93 = vmatprep.subr.mxu0 0.0
    %94 = vmatpush2.msra.mxu0 0.0
    %95 = vmatprep.subr.mxu0 0.0
    %96 = vmatpush2.msra.mxu0 0.0
    %97 = vmatprep.subr.mxu0 0.0
    %98 = vmatpush2.msra.mxu0 0.0
    %99 = vmatprep.subr.mxu0 0.0
    %100 = vmatpush2.msra.mxu0 0.0
    %101 = vmatprep.subr.mxu0 0.0
    %102 = vmatpush2.msra.mxu0 0.0
    %103 = vmatprep.subr.mxu0 0.0
    %104 = vmatpush2.msra.mxu0 0.0
    %105 = vmatprep.subr.mxu0 0.0
    %106 = vmatpush2.msra.mxu0 0.0
    %107 = vmatprep.mubr.f32.mxu0 0.0
    %108 = vmatmul.mubr.f32.gmra.mxu0 %v41
    %v109 = vpop.f32.mrf.mxu0
    %v110 = vadd.f32 0.0, %v109
    %v111 = vpop.f32.mrf.mxu0
    %112 = vdwg.mxu0
    %113 = vadd.xlane.f32.xlu0 %v110
    %v114 = vpop.xlane.xlu0 %113
    %v115 = vmul.f32 %v114, 0.0078125
    %v116 = vsub.f32 %v110, %v115
    %v117 = vmul.f32 %v116, %v116
    %118 = vadd.xlane.f32.xlu0 %v117
    %v119 = vpop.xlane.xlu0 %118
    %v120 = vmul.f32 %v119, 0.0078125
    %v121 = vadd.f32 %v120, 1e-05
    %v122 = vrsqrt.pop %v121
    %v123 = vmul.f32 %v116, %v122
    %124 = vst [vmem:[#allocation7] sm:$0xff] %v123
    // Predicated region
    $region18: #{tpu_custom_call.1} parent=1 // pred_check
      _
    $region19: #{tpu_custom_call.1} parent=1 // pred_check_branch
      %126 = sbr.rel (0) target = $region21
    $region20: #{tpu_custom_call.1} parent=1 // pred_region
      %s128 = ssub.s32 128, 128
      %129 = vsyncadd [#allocation4], %s128
      %s131 = sshll.u32 [#allocation7], 4
      %s132 = int_to_ptr.vmem [resolvable:$true] %s131
      %134 = dma.vmem_to_hbm [thread:$0]  %s132, 128, %s2, [#allocation4]
    $region21: #{tpu_custom_call.1} parent=1 // pred_fallthru
      _
    // Predicated region
    $region22: #{tpu_custom_call.1} parent=1 // pred_check
      _
    $region23: #{tpu_custom_call.1} parent=1 // pred_check_branch
      %136 = sbr.rel (0) target = $region25
    $region24: #{tpu_custom_call.1} parent=1 // pred_region
      %137 = dma.done [#allocation4], 128
    $region25: #{tpu_custom_call.1} parent=1 // pred_fallthru
      _
    %138 = vsyncpa [#allocation3], 1
    %139 = vsyncpa [#allocation6], 1
    %140 = vsyncpa [#allocation4], 1

</llo_original>
